<compile_context>
chip_gen: v7x
topology: tpu7x:2x2x1
jax: 0.10.0
libtpu: 0.0.40
codegen_flags: <defaults>
</compile_context>

<pallas_src>
import functools

import jax
import jax.numpy as jnp
from jax import lax
from jax.experimental import pallas as pl
from jax.experimental.pallas import tpu as pltpu

LANE = 128            # vreg lane width
SUB = 8               # vreg sublane count
NEG_BIG = -1.0e30     # finite "-inf" for the running-max accumulator


def _round_up(x, k):
    return ((x + k - 1) // k) * k


def _myloss_kernel(t_ref, o_ref, num_ref, den_ref, max_ref, *,
                   n_elems, tm, ch, steps):
    """Streaming, max-shift-stabilized accumulation of
         num = sum(target * exp(output - m)),  den = sum(exp(output - m))
       into one vreg-shaped (8, 128) accumulator triple per leading grid block
       (= per TensorCore slab).  Per-step work is purely elementwise (VPU/EUP);
       the only cross-lane reduction happens once in the tiny wrapper epilogue.
       The kernel is HBM-bandwidth bound on v5e/v6e/v7x, so all compute here
       rides for free under the tile DMA."""
    c = pl.program_id(0)
    i = pl.program_id(1)

    @pl.when(i == 0)
    def _init():
        num_ref[...] = jnp.zeros_like(num_ref)
        den_ref[...] = jnp.zeros_like(den_ref)
        max_ref[...] = jnp.full_like(max_ref, NEG_BIG)

    # Logical (unclamped) start row of this block in the flattened (rows, 128) view.
    start_row = (c * steps + i) * tm
    full_rows = n_elems // LANE          # static at trace time
    rem = n_elems % LANE                 # static at trace time

    r_per = ch // SUB
    n_ch = tm // ch

    def chunk(k, carry):
        m_acc, num_acc, den_acc = carry
        r0 = pl.multiple_of(k * ch, ch)

        # Inputs arrive in native dtype; upcast on the VPU (keeps HBM traffic minimal).
        tt = t_ref[pl.ds(r0, ch), :].astype(jnp.float32)        # (ch, 128)
        oo = o_ref[pl.ds(r0, ch), :].astype(jnp.float32)        # (ch, 128)

        # Element-level validity mask from the flat index (handles: partial last
        # block, clamped overhang blocks, and a sub-128 final row).
        grow = lax.broadcasted_iota(jnp.int32, (ch, LANE), 0) + (start_row + r0)
        if rem == 0:
            valid = grow < full_rows
        else:
            col = lax.broadcasted_iota(jnp.int32, (ch, LANE), 1)
            valid = (grow < full_rows) | ((grow == full_rows) & (col < rem))

        # Mask BEFORE any arithmetic: the VMEM overhang of partial/clamped blocks
        # is uninitialized and may hold NaN bit patterns.
        oo = jnp.where(valid, oo, NEG_BIG)
        tt = jnp.where(valid, tt, 0.0)
        vf = valid.astype(jnp.float32)

        oo3 = oo.reshape(r_per, SUB, LANE)                      # layout-preserving folds
        tt3 = tt.reshape(r_per, SUB, LANE)
        vf3 = vf.reshape(r_per, SUB, LANE)

        m_new = jnp.maximum(m_acc, jnp.max(oo3, axis=0))        # leading-axis reduce: VPU only
        alpha = jnp.exp(m_acc - m_new)                          # (8,128) rescale, EUP
        p = jnp.exp(oo3 - m_new[None, :, :]) * vf3              # exact 0 off the valid region
        num_new = num_acc * alpha + jnp.sum(tt3 * p, axis=0)
        den_new = den_acc * alpha + jnp.sum(p, axis=0)
        return m_new, num_new, den_new

    carry0 = (max_ref[...], num_ref[...], den_ref[...])
    m_f, num_f, den_f = lax.fori_loop(0, n_ch, chunk, carry0,
                                      unroll=(True if n_ch <= 4 else 4))
    max_ref[...] = m_f
    num_ref[...] = num_f
    den_ref[...] = den_f


def _device_config():
    """Generation-aware defaults: (ncores, per-input tile bytes, vmem_limit_bytes)."""
    try:
        kind = jax.devices()[0].device_kind.lower()
    except Exception:
        kind = ""
    if "v7" in kind:
        # v7x: 2 TensorCores, each with its own HBM path but only 64 MiB VMEM.
        # Both cores are mandatory for full bandwidth; keep 2 inputs x 2 buffers
        # x ~2 MiB plus bounded temporaries well inside 64 MiB.
        return 2, 2 * 1024 * 1024, 48 * 1024 * 1024
    if kind == "":
        # Unknown backend: conservative settings that fit every generation.
        return 1, 2 * 1024 * 1024, 48 * 1024 * 1024
    # v5e / v6e: single TensorCore, 128 MiB physical VMEM -> go for ~4 MiB tiles.
    return 1, 4 * 1024 * 1024, 64 * 1024 * 1024


def myloss(target, output, *, ncores=None, tile_bytes=None, vmem_limit=None):
    """loss = -(sum(target * exp(output)) / sum(exp(output)))
    Max-shift stabilized (unlike the PyTorch original, it stays finite for large outputs)."""
    assert target.shape == output.shape
    d_ncores, d_tile, d_vmem = _device_config()
    ncores = d_ncores if ncores is None else ncores
    tile_bytes = d_tile if tile_bytes is None else tile_bytes
    vmem_limit = d_vmem if vmem_limit is None else vmem_limit

    t = target.reshape(-1)
    o = output.reshape(-1)
    n = t.shape[0]
    itemsize = max(t.dtype.itemsize, o.dtype.itemsize)

    # Rows of the lane-dense (rows, 128) view; keep the row count a multiple of 8.
    m8 = _round_up(pl.cdiv(n, LANE), SUB)
    if m8 * LANE != n:
        # TODO(synk): for n not a multiple of 1024 this tiny (<1024 elem) pad still
        # costs XLA a full copy of the flat tensors; a fully copy-free path would
        # need 1D blocks.  Pad values are irrelevant: the kernel masks by flat index.
        t = jnp.pad(t, (0, m8 * LANE - n))
        o = jnp.pad(o, (0, m8 * LANE - n))
    t2 = t.reshape(m8, LANE)        # native dtype; upcast happens on the VPU in-kernel
    o2 = o.reshape(m8, LANE)

    # --- tile selection: big blocks, no divisibility requirement -----------------
    CH = 128                                                    # preferred inner-chunk rows
    cap_rows = max(CH, (tile_bytes // (LANE * itemsize)) // CH * CH)   # dtype-aware cap
    if m8 <= cap_rows:
        tm = min(m8, max(SUB, _round_up(pl.cdiv(m8, ncores), SUB)))
    else:
        tm = cap_rows
    ch = next(d for d in (128, 64, 32, 16, 8) if tm % d == 0)   # inner chunk divides tm

    nblocks = pl.cdiv(m8, tm)
    steps = pl.cdiv(nblocks, ncores)

    def in_index(c, i):
        # Clamp so the DMA never walks past the last block; the kernel's element
        # mask zeroes out the duplicated (overhang) work.
        return (jnp.minimum(c * steps + i, nblocks - 1), 0)

    in_spec = pl.BlockSpec((tm, LANE), in_index)
    part_shape = jax.ShapeDtypeStruct((ncores * SUB, LANE), jnp.float32)
    part_spec = pl.BlockSpec((SUB, LANE), lambda c, i: (c, 0))

    kernel = functools.partial(_myloss_kernel, n_elems=n, tm=tm, ch=ch, steps=steps)

    num_p, den_p, max_p = pl.pallas_call(
        kernel,
        out_shape=(part_shape, part_shape, part_shape),
        grid_spec=pltpu.PrefetchScalarGridSpec(
            num_scalar_prefetch=0,
            grid=(ncores, steps),              # leading "parallel" axis: TC sharding on v7x
            in_specs=[in_spec, in_spec],
            out_specs=[part_spec, part_spec, part_spec],
        ),
        compiler_params=pltpu.CompilerParams(
            dimension_semantics=("parallel", "arbitrary"),
            vmem_limit_bytes=vmem_limit,
        ),
        cost_estimate=pl.CostEstimate(
            flops=6 * n,
            transcendentals=n,
            bytes_accessed=2 * n * itemsize + 3 * ncores * SUB * LANE * 4,
        ),
    )(t2, o2)

    # Tiny epilogue over 3 x (ncores*8, 128) partials (plain XLA): combine slabs.
    g = jnp.max(max_p)
    w = jnp.exp(max_p - g)
    num = jnp.sum(num_p * w)
    den = jnp.sum(den_p * w)
    return -(num / den)


def myloss_ref(target, output):
    t = target.astype(jnp.float32)
    e = jnp.exp(output.astype(jnp.float32))
    return -(jnp.sum(t * e) / jnp.sum(e))


if __name__ == "__main__":
    key = jax.random.PRNGKey(0)
    k1, k2, k3, k4, k5, k6 = jax.random.split(key, 6)

    # 1) Canonical NCHW-shaped case (lane-aligned: zero wrapper-side copies).
    shape = (2, 4, 16, 16)
    target = jax.random.uniform(k1, shape, dtype=jnp.float32)
    output = jax.random.normal(k2, shape, dtype=jnp.float32)
    loss = jax.block_until_ready(myloss(target, output))
    ref = jax.block_until_ready(myloss_ref(target, output))
    assert jnp.allclose(loss, ref, rtol=1e-5, atol=1e-5), (loss, ref)

    # 2) Ragged size (n % 128 != 0): exercises the in-kernel element mask.
    shape2 = (3, 5, 7, 11)
    t_r = jax.random.uniform(k3, shape2, dtype=jnp.float32)
    o_r = jax.random.normal(k4, shape2, dtype=jnp.float32)
    l2 = jax.block_until_ready(myloss(t_r, o_r))
    r2 = jax.block_until_ready(myloss_ref(t_r, o_r))
    assert jnp.allclose(l2, r2, rtol=1e-4, atol=1e-5), (l2, r2)

    # 3) Multi-block path (tiny tile override forces several grid steps plus a
    #    clamped overhang block when the block count does not divide by ncores).
    shape3 = (2, 4, 24, 256)
    t_m = jax.random.uniform(k5, shape3, dtype=jnp.float32)
    o_m = jax.random.normal(k6, shape3, dtype=jnp.float32)
    l3 = jax.block_until_ready(myloss(t_m, o_m, tile_bytes=64 * 1024))
    r3 = jax.block_until_ready(myloss_ref(t_m, o_m))
    assert jnp.allclose(l3, r3, rtol=1e-4, atol=1e-5), (l3, r3)

    print("KERNEL_OK")
</pallas_src>

<mosaic_0001>
module attributes {stable_mosaic.version = 11 : i64} {
  func.func @_myloss_kernel(%arg0: i32, %arg1: i32, %arg2: memref<16x128xf32, #tpu.memory_space<vmem>>, %arg3: memref<16x128xf32, #tpu.memory_space<vmem>>, %arg4: memref<8x128xf32, #tpu.memory_space<vmem>>, %arg5: memref<8x128xf32, #tpu.memory_space<vmem>>, %arg6: memref<8x128xf32, #tpu.memory_space<vmem>>) attributes {dimension_semantics = [#tpu.dimension_semantics<parallel>, #tpu.dimension_semantics<arbitrary>], iteration_bounds = array<i64: 1, 1>, scalar_prefetch = 0 : i64, scratch_operands = 0 : i64, tpu.core_type = #tpu.core_type<tc>, window_params = [{transform_indices = @transform_0, window_bounds = array<i64: 16, 128>}, {transform_indices = @transform_1, window_bounds = array<i64: 16, 128>}, {transform_indices = @transform_2, window_bounds = array<i64: 8, 128>}, {transform_indices = @transform_3, window_bounds = array<i64: 8, 128>}, {transform_indices = @transform_4, window_bounds = array<i64: 8, 128>}]} {
    %c0_i32 = arith.constant 0 : i32
    %0 = arith.cmpi eq, %arg1, %c0_i32 : i32
    %1 = arith.extui %0 : i1 to i32
    %c0_i32_0 = arith.constant 0 : i32
    %2 = arith.cmpi ne, %1, %c0_i32_0 : i32
    scf.if %2 {
      %cst_22 = arith.constant 0.000000e+00 : f32
      %49 = vector.broadcast %cst_22 : f32 to vector<8x128xf32>
      %c0_23 = arith.constant 0 : index
      %c0_24 = arith.constant 0 : index
      %50 = vector.load %arg4[%c0_23, %c0_24] : memref<8x128xf32, #tpu.memory_space<vmem>>, vector<8x128xf32>
      tpu.vector_store %arg4[%c0_23, %c0_24], %49 {strides = array<i32>} : memref<8x128xf32, #tpu.memory_space<vmem>>, vector<8x128xf32>,
      %cst_25 = arith.constant 0.000000e+00 : f32
      %51 = vector.broadcast %cst_25 : f32 to vector<8x128xf32>
      %c0_26 = arith.constant 0 : index
      %c0_27 = arith.constant 0 : index
      %52 = vector.load %arg5[%c0_26, %c0_27] : memref<8x128xf32, #tpu.memory_space<vmem>>, vector<8x128xf32>
      tpu.vector_store %arg5[%c0_26, %c0_27], %51 {strides = array<i32>} : memref<8x128xf32, #tpu.memory_space<vmem>>, vector<8x128xf32>,
      %cst_28 = arith.constant -1.000000e+30 : f32
      %53 = vector.broadcast %cst_28 : f32 to vector<8x128xf32>
      %c0_29 = arith.constant 0 : index
      %c0_30 = arith.constant 0 : index
      %54 = vector.load %arg6[%c0_29, %c0_30] : memref<8x128xf32, #tpu.memory_space<vmem>>, vector<8x128xf32>
      tpu.vector_store %arg6[%c0_29, %c0_30], %53 {strides = array<i32>} : memref<8x128xf32, #tpu.memory_space<vmem>>, vector<8x128xf32>,
    } else {
    }
    %c1_i32 = arith.constant 1 : i32
    %3 = arith.muli %arg0, %c1_i32 : i32
    %4 = arith.addi %3, %arg1 : i32
    %c16_i32 = arith.constant 16 : i32
    %5 = arith.muli %4, %c16_i32 : i32
    %c0 = arith.constant 0 : index
    %c0_1 = arith.constant 0 : index
    %6 = vector.load %arg6[%c0, %c0_1] : memref<8x128xf32, #tpu.memory_space<vmem>>, vector<8x128xf32>
    %c0_2 = arith.constant 0 : index
    %c0_3 = arith.constant 0 : index
    %7 = vector.load %arg4[%c0_2, %c0_3] : memref<8x128xf32, #tpu.memory_space<vmem>>, vector<8x128xf32>
    %c0_4 = arith.constant 0 : index
    %c0_5 = arith.constant 0 : index
    %8 = vector.load %arg5[%c0_4, %c0_5] : memref<8x128xf32, #tpu.memory_space<vmem>>, vector<8x128xf32>
    %c0_i32_6 = arith.constant 0 : i32
    %c16_i32_7 = arith.constant 16 : i32
    %9 = arith.muli %c0_i32_6, %c16_i32_7 : i32
    %10 = tpu.assume_multiple %9, 16 : i32
    %11 = arith.index_cast %10 : i32 to index
    %c0_8 = arith.constant 0 : index
    %12 = vector.load %arg2[%11, %c0_8] : memref<16x128xf32, #tpu.memory_space<vmem>>, vector<16x128xf32>
    %13 = arith.index_cast %10 : i32 to index
    %c0_9 = arith.constant 0 : index
    %14 = vector.load %arg3[%13, %c0_9] : memref<16x128xf32, #tpu.memory_space<vmem>>, vector<16x128xf32>
    %15 = tpu.iota {dimensions = array<i32: 0>} : vector<16x128xi32>
    %16 = arith.addi %5, %10 : i32
    %17 = vector.broadcast %16 : i32 to vector<16x128xi32>
    %18 = arith.addi %15, %17 : vector<16x128xi32>
    %c16_i32_10 = arith.constant 16 : i32
    %19 = vector.broadcast %c16_i32_10 : i32 to vector<16x128xi32>
    %20 = arith.cmpi slt, %18, %19 : vector<16x128xi32>
    %cst = arith.constant -1.000000e+30 : f32
    %21 = vector.broadcast %cst : f32 to vector<16x128xf32>
    %22 = arith.select %20, %14, %21 : vector<16x128xi1>, vector<16x128xf32>
    %cst_11 = arith.constant 0.000000e+00 : f32
    %23 = vector.broadcast %cst_11 : f32 to vector<16x128xf32>
    %24 = arith.select %20, %12, %23 : vector<16x128xi1>, vector<16x128xf32>
    %25 = arith.extui %20 : vector<16x128xi1> to vector<16x128xi32>
    %26 = arith.sitofp %25 : vector<16x128xi32> to vector<16x128xf32>
    %27 = vector.shape_cast %22 : vector<16x128xf32> to vector<2x8x128xf32>
    %28 = vector.shape_cast %24 : vector<16x128xf32> to vector<2x8x128xf32>
    %29 = vector.shape_cast %26 : vector<16x128xf32> to vector<2x8x128xf32>
    %cst_12 = arith.constant dense<0xFF800000> : vector<8x128xf32>
    %30 = vector.multi_reduction <maximumf>, %27, %cst_12 [0] : vector<2x8x128xf32> to vector<8x128xf32>
    %31 = arith.maximumf %6, %30 : vector<8x128xf32>
    %32 = arith.subf %6, %31 : vector<8x128xf32>
    %33 = math.exp %32 : vector<8x128xf32>
    %34 = vector.shape_cast %31 : vector<8x128xf32> to vector<1x8x128xf32>
    %35 = vector.broadcast %34 : vector<1x8x128xf32> to vector<2x8x128xf32>
    %36 = arith.subf %27, %35 : vector<2x8x128xf32>
    %37 = math.exp %36 : vector<2x8x128xf32>
    %38 = arith.mulf %37, %29 : vector<2x8x128xf32>
    %39 = arith.mulf %7, %33 : vector<8x128xf32>
    %40 = arith.mulf %28, %38 : vector<2x8x128xf32>
    %cst_13 = arith.constant dense<0.000000e+00> : vector<8x128xf32>
    %41 = vector.multi_reduction <add>, %40, %cst_13 [0] : vector<2x8x128xf32> to vector<8x128xf32>
    %42 = arith.addf %39, %41 : vector<8x128xf32>
    %43 = arith.mulf %8, %33 : vector<8x128xf32>
    %cst_14 = arith.constant dense<0.000000e+00> : vector<8x128xf32>
    %44 = vector.multi_reduction <add>, %38, %cst_14 [0] : vector<2x8x128xf32> to vector<8x128xf32>
    %45 = arith.addf %43, %44 : vector<8x128xf32>
    %c1_i32_15 = arith.constant 1 : i32
    %c0_16 = arith.constant 0 : index
    %c0_17 = arith.constant 0 : index
    %46 = vector.load %arg6[%c0_16, %c0_17] : memref<8x128xf32, #tpu.memory_space<vmem>>, vector<8x128xf32>
    tpu.vector_store %arg6[%c0_16, %c0_17], %31 {strides = array<i32>} : memref<8x128xf32, #tpu.memory_space<vmem>>, vector<8x128xf32>,
    %c0_18 = arith.constant 0 : index
    %c0_19 = arith.constant 0 : index
    %47 = vector.load %arg4[%c0_18, %c0_19] : memref<8x128xf32, #tpu.memory_space<vmem>>, vector<8x128xf32>
    tpu.vector_store %arg4[%c0_18, %c0_19], %42 {strides = array<i32>} : memref<8x128xf32, #tpu.memory_space<vmem>>, vector<8x128xf32>,
    %c0_20 = arith.constant 0 : index
    %c0_21 = arith.constant 0 : index
    %48 = vector.load %arg5[%c0_20, %c0_21] : memref<8x128xf32, #tpu.memory_space<vmem>>, vector<8x128xf32>
    tpu.vector_store %arg5[%c0_20, %c0_21], %45 {strides = array<i32>} : memref<8x128xf32, #tpu.memory_space<vmem>>, vector<8x128xf32>,
    return
  }
  func.func @transform_0(%arg0: i32, %arg1: i32) -> (i32, i32) {
    %c1_i32 = arith.constant 1 : i32
    %0 = arith.muli %arg0, %c1_i32 : i32
    %1 = arith.addi %0, %arg1 : i32
    %c0_i32 = arith.constant 0 : i32
    %2 = arith.minsi %1, %c0_i32 : i32
    %c0_i32_0 = arith.constant 0 : i32
    %c0_i32_1 = arith.constant 0 : i32
    return %2, %c0_i32_0 : i32, i32
  }
  func.func @transform_1(%arg0: i32, %arg1: i32) -> (i32, i32) {
    %c1_i32 = arith.constant 1 : i32
    %0 = arith.muli %arg0, %c1_i32 : i32
    %1 = arith.addi %0, %arg1 : i32
    %c0_i32 = arith.constant 0 : i32
    %2 = arith.minsi %1, %c0_i32 : i32
    %c0_i32_0 = arith.constant 0 : i32
    %c0_i32_1 = arith.constant 0 : i32
    return %2, %c0_i32_0 : i32, i32
  }
  func.func @transform_2(%arg0: i32, %arg1: i32) -> (i32, i32) {
    %c0_i32 = arith.constant 0 : i32
    %c0_i32_0 = arith.constant 0 : i32
    return %arg0, %c0_i32 : i32, i32
  }
  func.func @transform_3(%arg0: i32, %arg1: i32) -> (i32, i32) {
    %c0_i32 = arith.constant 0 : i32
    %c0_i32_0 = arith.constant 0 : i32
    return %arg0, %c0_i32 : i32, i32
  }
  func.func @transform_4(%arg0: i32, %arg1: i32) -> (i32, i32) {
    %c0_i32 = arith.constant 0 : i32
    %c0_i32_0 = arith.constant 0 : i32
    return %arg0, %c0_i32 : i32, i32
  }
}

</mosaic_0001>

<llo_original>
// kernel: tpu_custom_call.1
$region0: #{tpu_custom_call.1}
  #allocation0 [shape = 'u32[]', space=smem, size = 0x4, offset = 0x4, fixed_abs, tag = 'smem constant byte address 0x4 - core index']
  #allocation1 [shape = 'u32[144,128]{1,0:T(1,128)}', space=vmem, size = 0x12000, scoped, tag = 'internal scratch']
  %s0 = inlined_call_operand.hbm [shape: f32[16,128], index: 0, kind: input, shape index: {}]
  %s1 = inlined_call_operand.hbm [shape: f32[16,128], index: 1, kind: input, shape index: {}]
  %s2 = inlined_call_operand.hbm [shape: f32[8,128], index: 2, kind: output, shape index: {0}]
  %s3 = inlined_call_operand.hbm [shape: f32[8,128], index: 3, kind: output, shape index: {1}]
  %s4 = inlined_call_operand.hbm [shape: f32[8,128], index: 4, kind: output, shape index: {2}]
  %5 = xla_tuple %s2, %s3, %s4
  %s6 = sld [smem:[#allocation0]]
  $region46: #{tpu_custom_call.1} parent=0
    _
  %s8 = ssub.s32 1, %s6
  %s9 = scalar_select 0, %s8, %s6
  $region1: #{tpu_custom_call.1} parent=0
    #allocation2 [shape = 'u8[8192]{0}', space=vmem, size = 0x2000, scoped, tag = 'input window, operand 0, single buffered']
    #allocation3 [shape = 's32[1]{0}', space=sflag, size = 0x4, scoped, tag = 'scoped memory for tpu_custom_call.1']
    #allocation4 [shape = 's32[1]{0}', space=sflag, size = 0x4, scoped, tag = 'scoped memory for tpu_custom_call.1']
    #allocation5 [shape = 'u8[8192]{0}', space=vmem, size = 0x2000, scoped, tag = 'input window, operand 1, single buffered']
    #allocation6 [shape = 's32[1]{0}', space=sflag, size = 0x4, scoped, tag = 'scoped memory for tpu_custom_call.1']
    #allocation7 [shape = 'u8[4096]{0}', space=vmem, size = 0x1000, scoped, tag = 'output window, operand 0, single buffered']
    #allocation8 [shape = 'u8[4096]{0}', space=vmem, size = 0x1000, scoped, tag = 'output window, operand 1, single buffered']
    #allocation9 [shape = 's32[1]{0}', space=sflag, size = 0x4, scoped, tag = 'scoped memory for tpu_custom_call.1']
    #allocation10 [shape = 'u8[4096]{0}', space=vmem, size = 0x1000, scoped, tag = 'output window, operand 2, single buffered']
    %10 = vsyncpa [#allocation3], 0
    %11 = vsyncpa [#allocation6], 0
    %12 = vsyncpa [#allocation4], 0
    %13 = vsyncpa [#allocation9], 0
    // Predicated region
    $region2: #{tpu_custom_call.1} parent=1 // pred_check
      _
    $region3: #{tpu_custom_call.1} parent=1 // pred_check_branch
      %15 = sbr.rel (0) target = $region5
    $region4: #{tpu_custom_call.1} parent=1 // pred_region
      %s16 = sadd.s32 0, 0
      %p17 = scmp.lt.s32.totalorder %s16, 0
      %s18 = scalar_select %p17, %s16, 0
      %s19 = smul.u32 2, %s18
      %s21 = ssub.s32 256, 256
      %22 = vsyncadd [#allocation3], %s21
      %s23 = smul.addr %s19, 128
      %s24 = scalar_lea.hbm %s0, %s23
      %s25 = sshll.u32 [#allocation2], 4
      %s26 = int_to_ptr.vmem [resolvable:$true] %s25
      %31 = dma.hbm_to_vmem [thread:$0]  %s24, 256, %s26, [#allocation3], 128, 128, 8
    $region5: #{tpu_custom_call.1} parent=1 // pred_fallthru
      _
    // Predicated region
    $region6: #{tpu_custom_call.1} parent=1 // pred_check
      _
    $region7: #{tpu_custom_call.1} parent=1 // pred_check_branch
      %33 = sbr.rel (0) target = $region9
    $region8: #{tpu_custom_call.1} parent=1 // pred_region
      %s34 = sadd.s32 0, 0
      %p35 = scmp.lt.s32.totalorder %s34, 0
      %s36 = scalar_select %p35, %s34, 0
      %s37 = smul.u32 2, %s36
      %s39 = ssub.s32 256, 256
      %40 = vsyncadd [#allocation6], %s39
      %s41 = smul.addr %s37, 128
      %s42 = scalar_lea.hbm %s1, %s41
      %s43 = sshll.u32 [#allocation5], 4
      %s44 = int_to_ptr.vmem [resolvable:$true] %s43
      %49 = dma.hbm_to_vmem [thread:$0]  %s42, 256, %s44, [#allocation6], 128, 128, 8
    $region9: #{tpu_custom_call.1} parent=1 // pred_fallthru
      _
    // Predicated region
    $region10: #{tpu_custom_call.1} parent=1 // pred_check
      _
    $region11: #{tpu_custom_call.1} parent=1 // pred_check_branch
      %51 = sbr.rel (0) target = $region13
    $region12: #{tpu_custom_call.1} parent=1 // pred_region
      %52 = dma.done [#allocation3], 256
    $region13: #{tpu_custom_call.1} parent=1 // pred_fallthru
      _
    // Predicated region
    $region14: #{tpu_custom_call.1} parent=1 // pred_check
      _
    $region15: #{tpu_custom_call.1} parent=1 // pred_check_branch
      %54 = sbr.rel (0) target = $region17
    $region16: #{tpu_custom_call.1} parent=1 // pred_region
      %55 = dma.done [#allocation6], 256
    $region17: #{tpu_custom_call.1} parent=1 // pred_fallthru
      _
    %s56 = sadd.s32 0, 0
    %p57 = scmp.lt.s32.totalorder %s56, 0
    %s58 = scalar_select %p57, %s56, 0
    %s59 = smul.u32 2, %s58
    %s60 = sadd.s32 0, 0
    %p61 = scmp.lt.s32.totalorder %s60, 0
    %s62 = scalar_select %p61, %s60, 0
    %s63 = smul.u32 2, %s62
    %p64 = scmp.eq.s32.totalorder 0, 0
    // Predicated region
    $region18: #{tpu_custom_call.1} parent=1 // pred_check
      %p65 = pneg %p64
    $region19: #{tpu_custom_call.1} parent=1 // pred_check_branch
      %67 = sbr.rel (%p65) target = $region21
    $region20: #{tpu_custom_call.1} parent=1 // pred_region
      %68 = vst [vmem:[#allocation7] sm:$0xff] 0.0
      %69 = vst [vmem:[#allocation8] sm:$0xff] 0.0
      %70 = vst [vmem:[#allocation10] sm:$0xff] -1e+30
    $region21: #{tpu_custom_call.1} parent=1 // pred_fallthru
      _
    %s71 = sadd.s32 0, 0
    %s72 = smul.u32 %s71, 16
    %v73 = vld [vmem:[#allocation10] sm:$0xff]
    %v74 = vld [vmem:[#allocation7] sm:$0xff]
    %v75 = vld [vmem:[#allocation8] sm:$0xff]
    %v76 = vld [vmem:[#allocation2] sm:$0xff]
    %v77 = vld [vmem:[#allocation2 + $0x8] sm:$0xff]
    %v78 = vld [vmem:[#allocation5] sm:$0xff]
    %v79 = vld [vmem:[#allocation5 + $0x8] sm:$0xff]
    %v80 = vlaneseq
    %v81 = vshrl.u32 %v80, 7
    %v82 = vadd.s32 %v81, 8
    %s83 = sadd.s32 %s72, 0
    %v84 = vstv %s83
    %v85 = vadd.s32 %v81, %v84
    %v86 = vadd.s32 %v82, %v84
    %vm87 = vcmp.lt.s32.totalorder %v85, 16
    %vm88 = vcmp.lt.s32.totalorder %v86, 16
    %v89 = vsel %vm87, %v78, -1e+30
    %v90 = vsel %vm88, %v79, -1e+30
    %v91 = vsel %vm87, %v76, 0.0
    %v92 = vsel %vm88, %v77, 0.0
    %v93 = vsel %vm87, 1, 0
    %v94 = vsel %vm88, 1, 0
    %v95 = vcvt.s32.f32 %v93
    %v96 = vcvt.s32.f32 %v94
    %v97 = vmax.f32 %v89, %v90
    %v98 = vmax.f32 %v73, %v97
    %v99 = vsub.f32 %v73, %v98
    %v100 = vmul.f32 %v99, 1.442695
    %v101 = vpow.pop %v100
    %v102 = vsub.f32 %v89, %v98
    %v103 = vsub.f32 %v90, %v98
    %v104 = vmul.f32 %v102, 1.442695
    %v105 = vpow.pop %v104
    %v106 = vmul.f32 %v103, 1.442695
    %v107 = vpow.pop %v106
    %v108 = vmul.f32 %v105, %v95
    %v109 = vmul.f32 %v107, %v96
    %v110 = vmul.f32 %v74, %v101
    %v111 = vmul.f32 %v91, %v108
    %v112 = vmul.f32 %v92, %v109
    %v113 = vadd.f32 %v111, %v112
    %v114 = vadd.f32 %v110, %v113
    %v115 = vmul.f32 %v75, %v101
    %v116 = vadd.f32 %v108, %v109
    %v117 = vadd.f32 %v115, %v116
    %118 = vst [vmem:[#allocation10] sm:$0xff] %v98
    %119 = vst [vmem:[#allocation7] sm:$0xff] %v114
    %120 = vst [vmem:[#allocation8] sm:$0xff] %v117
    // Predicated region
    $region22: #{tpu_custom_call.1} parent=1 // pred_check
      _
    $region23: #{tpu_custom_call.1} parent=1 // pred_check_branch
      %122 = sbr.rel (0) target = $region25
    $region24: #{tpu_custom_call.1} parent=1 // pred_region
      %s124 = ssub.s32 128, 128
      %125 = vsyncadd [#allocation4], %s124
      %s127 = sshll.u32 [#allocation7], 4
      %s128 = int_to_ptr.vmem [resolvable:$true] %s127
      %130 = dma.vmem_to_hbm [thread:$0]  %s128, 128, %s2, [#allocation4]
    $region25: #{tpu_custom_call.1} parent=1 // pred_fallthru
      _
    // Predicated region
    $region26: #{tpu_custom_call.1} parent=1 // pred_check
      _
    $region27: #{tpu_custom_call.1} parent=1 // pred_check_branch
      %132 = sbr.rel (0) target = $region29
    $region28: #{tpu_custom_call.1} parent=1 // pred_region
      %s134 = ssub.s32 128, 128
      %135 = vsyncadd [#allocation9], %s134
      %s137 = sshll.u32 [#allocation8], 4
      %s138 = int_to_ptr.vmem [resolvable:$true] %s137
      %140 = dma.vmem_to_hbm [thread:$0]  %s138, 128, %s3, [#allocation9]
    $region29: #{tpu_custom_call.1} parent=1 // pred_fallthru
      _
    // Predicated region
    $region30: #{tpu_custom_call.1} parent=1 // pred_check
      _
    $region31: #{tpu_custom_call.1} parent=1 // pred_check_branch
      %142 = sbr.rel (0) target = $region33
    $region32: #{tpu_custom_call.1} parent=1 // pred_region
      %s144 = ssub.s32 128, 128
      %145 = vsyncadd [#allocation9], %s144
      %s147 = sshll.u32 [#allocation10], 4
      %s148 = int_to_ptr.vmem [resolvable:$true] %s147
      %150 = dma.vmem_to_hbm [thread:$0]  %s148, 128, %s4, [#allocation9]
    $region33: #{tpu_custom_call.1} parent=1 // pred_fallthru
      _
    // Predicated region
    $region34: #{tpu_custom_call.1} parent=1 // pred_check
      _
    $region35: #{tpu_custom_call.1} parent=1 // pred_check_branch
      %152 = sbr.rel (0) target = $region37
    $region36: #{tpu_custom_call.1} parent=1 // pred_region
      %153 = dma.done [#allocation4], 128
    $region37: #{tpu_custom_call.1} parent=1 // pred_fallthru
      _
    // Predicated region
    $region38: #{tpu_custom_call.1} parent=1 // pred_check
      _
    $region39: #{tpu_custom_call.1} parent=1 // pred_check_branch
      %155 = sbr.rel (0) target = $region41
    $region40: #{tpu_custom_call.1} parent=1 // pred_region
      %156 = dma.done [#allocation9], 128
    $region41: #{tpu_custom_call.1} parent=1 // pred_fallthru
      _
    // Predicated region
    $region42: #{tpu_custom_call.1} parent=1 // pred_check
      _
    $region43: #{tpu_custom_call.1} parent=1 // pred_check_branch
      %158 = sbr.rel (0) target = $region45
    $region44: #{tpu_custom_call.1} parent=1 // pred_region
      %159 = dma.done [#allocation9], 128
    $region45: #{tpu_custom_call.1} parent=1 // pred_fallthru
      _
    %160 = vsyncpa [#allocation3], 1
    %161 = vsyncpa [#allocation6], 1
    %162 = vsyncpa [#allocation4], 1
    %163 = vsyncpa [#allocation9], 1

</llo_original>
